<compile_context>
chip_gen: v5e
topology: v5e:2x2
jax: 0.10.0
libtpu: 0.0.40
codegen_flags: <defaults>
</compile_context>

<pallas_src>
import functools

import jax
import jax.numpy as jnp
from jax.experimental import pallas as pl
from jax.experimental.pallas import tpu as pltpu


# --------------------------------------------------------------------------- #
# Kernels
# --------------------------------------------------------------------------- #
def _fused_kernel(x_ref, w_ref, b_ref, o_ref):
    """One block-banded matmul per grid step.

    x_ref: (1, C_in*T,     St)    -- St lane-dense
    w_ref: (C_out*T_out, C_in*T)  -- grid-invariant (fetched once)
    b_ref: (C_out*T_out, 1)       -- f32
    o_ref: (1, C_out*T_out, St)
    """
    acc = jnp.dot(w_ref[...], x_ref[0], preferred_element_type=jnp.float32)
    o_ref[0] = (acc + b_ref[...]).astype(o_ref.dtype)


def _tap_kernel(x_ref, w_ref, b_ref, o_ref, *, stride):
    """Per-tap fallback for large channel counts (W_exp no longer tiny).

    x_ref: (1, C_in, T, St); w_ref: (K, C_out, C_in); b_ref: (C_out, 1) f32
    o_ref: (1, C_out, T_out, St)
    """
    K = w_ref.shape[0]
    C_out, T_out, St = o_ref.shape[1], o_ref.shape[2], o_ref.shape[3]
    bias = jnp.broadcast_to(b_ref[...], (C_out, St))      # hoisted, reused
    for to in range(T_out):                               # static unroll (small)
        acc = bias                                        # bias folded into init
        for k in range(K):
            t_in = stride * to + k - (K - 1)              # causal-padding offset
            if t_in < 0:
                continue                                  # tap falls in the zero pad
            acc = acc + jnp.dot(w_ref[k], x_ref[0, :, t_in, :],
                                preferred_element_type=jnp.float32)
        o_ref[0, :, to, :] = acc.astype(o_ref.dtype)


# --------------------------------------------------------------------------- #
# Tiling helpers
# --------------------------------------------------------------------------- #
def _vmem_capacity_bytes():
    try:
        info = pltpu.get_tpu_info()
        cap = int(getattr(info, "vmem_capacity_bytes", 0))
        if cap > 0:
            return cap
    except Exception:
        pass
    return 64 * 1024 * 1024          # conservative default (v7x per-TensorCore)


def _pick_s_tile(S, B, per_lane_bytes, vmem_cap_bytes, min_grid_steps=8):
    """Lane tile St: a multiple of 128 (or S itself) such that
       (a) one in+out block pair stays under ~1/4 of VMEM (double-buffered pair
           then uses <= half, leaving room for weights / compiler scratch), and
       (b) there are enough grid steps for pipelining and both v7x cores."""
    budget = vmem_cap_bytes // 4
    cap_lanes = max(128, budget // max(per_lane_bytes, 1))
    s_tiles_wanted = max(1, -(-min_grid_steps // max(B, 1)))    # ceil
    lanes_for_steps = -(-S // s_tiles_wanted)                   # ceil
    st = min(cap_lanes, max(lanes_for_steps, 128))
    if st >= S:
        return S                          # full-extent block (legal for any S)
    return max(128, (st // 128) * 128)    # multiple of 128 required when < S


# --------------------------------------------------------------------------- #
# Wrapper
# --------------------------------------------------------------------------- #
@functools.partial(jax.jit, static_argnames=("stride", "force_impl"))
def temporal_downsample2x(x, weight, bias, *, stride=2, force_impl=None):
    """x: (B, C_in, T, H, W); weight: (C_out, C_in, K); bias: (C_out,)."""
    B, C_in, T, H, W = x.shape
    C_out, C_in_w, K = weight.shape
    assert C_in_w == C_in
    T_out = (T - 1) // stride + 1         # causal pad (K-1), then stride-K conv
    S = H * W
    itemsize = jnp.dtype(x.dtype).itemsize

    in_rows, out_rows = C_in * T, C_out * T_out
    vmem_cap = _vmem_capacity_bytes()
    per_lane = (in_rows + out_rows) * itemsize
    St = _pick_s_tile(S, B, per_lane, vmem_cap)
    grid = (B, pl.cdiv(S, St))

    # Fused single-matmul path unless the expanded weight would stop being small.
    use_fused = (in_rows <= 1024 and out_rows <= 1024)
    if force_impl == "fused":
        use_fused = True
    elif force_impl == "tap":
        use_fused = False

    w_bytes = (out_rows * in_rows if use_fused else K * C_out * C_in) * itemsize
    needed = 2 * per_lane * St + w_bytes + out_rows * 4 + (2 << 20)
    vmem_limit = min(int(0.9 * vmem_cap), max(needed, 32 << 20))
    vmem_limit = max(vmem_limit, needed)
    cparams = pltpu.CompilerParams(
        dimension_semantics=("parallel", "parallel"),
        vmem_limit_bytes=int(vmem_limit))

    if use_fused:
        # ---- block-banded expanded weight (exact: gather + where only) ----
        # W_exp[co*T_out + to, ci*T + t] = weight[co, ci, k]
        #   where k = t - stride*to + (K-1), if 0 <= k < K, else 0.
        to_idx = jnp.arange(T_out)
        t_idx = jnp.arange(T)
        k_for = t_idx[None, :] - stride * to_idx[:, None] + (K - 1)  # (T_out, T)
        valid = (k_for >= 0) & (k_for < K)
        k_clip = jnp.clip(k_for, 0, K - 1)
        w_g = weight[:, :, k_clip]                    # (C_out, C_in, T_out, T)
        w_g = jnp.where(valid[None, None], w_g, 0.0)
        w_exp = jnp.transpose(w_g, (0, 2, 1, 3)).reshape(out_rows, in_rows)
        w_exp = w_exp.astype(x.dtype)
        b_exp = jnp.repeat(bias.astype(jnp.float32), T_out).reshape(out_rows, 1)

        x3 = x.reshape(B, in_rows, S)                 # free contiguous reshape

        y = pl.pallas_call(
            _fused_kernel,
            out_shape=jax.ShapeDtypeStruct((B, out_rows, S), x.dtype),
            grid_spec=pltpu.PrefetchScalarGridSpec(
                num_scalar_prefetch=0,
                grid=grid,
                in_specs=[
                    pl.BlockSpec((1, in_rows, St), lambda b, s: (b, 0, s)),
                    pl.BlockSpec((out_rows, in_rows), lambda b, s: (0, 0)),
                    pl.BlockSpec((out_rows, 1), lambda b, s: (0, 0)),
                ],
                out_specs=pl.BlockSpec((1, out_rows, St),
                                       lambda b, s: (b, 0, s)),
            ),
            compiler_params=cparams,
        )(x3, w_exp, b_exp)
        return y.reshape(B, C_out, T_out, H, W)

    # ---- fallback: per-tap loop (large channel / compute-bound regime) ----
    # St naturally shrinks here (per_lane is large), keeping the f32 acc small.
    x4 = x.reshape(B, C_in, T, S)
    w_t = jnp.transpose(weight, (2, 0, 1)).astype(x.dtype)     # (K, C_out, C_in)
    b2 = bias.reshape(C_out, 1).astype(jnp.float32)
    y = pl.pallas_call(
        functools.partial(_tap_kernel, stride=stride),
        out_shape=jax.ShapeDtypeStruct((B, C_out, T_out, S), x.dtype),
        grid_spec=pltpu.PrefetchScalarGridSpec(
            num_scalar_prefetch=0,
            grid=grid,
            in_specs=[
                pl.BlockSpec((1, C_in, T, St), lambda b, s: (b, 0, 0, s)),
                pl.BlockSpec((K, C_out, C_in), lambda b, s: (0, 0, 0)),
                pl.BlockSpec((C_out, 1), lambda b, s: (0, 0)),
            ],
            out_specs=pl.BlockSpec((1, C_out, T_out, St),
                                   lambda b, s: (b, 0, 0, s)),
        ),
        compiler_params=cparams,
    )(x4, w_t, b2)
    return y.reshape(B, C_out, T_out, H, W)


# --------------------------------------------------------------------------- #
# Pure-JAX reference (transliteration of the PyTorch forward)
# --------------------------------------------------------------------------- #
def _reference(x, weight, bias, stride=2):
    B, C_in, T, H, W = x.shape
    C_out, _, K = weight.shape
    xr = jnp.transpose(x, (0, 3, 4, 1, 2)).reshape(B * H * W, C_in, T)
    xr = jnp.pad(xr, ((0, 0), (0, 0), (K - 1, 0)))            # causal pad
    T_out = (T - 1) // stride + 1
    y = jnp.zeros((B * H * W, C_out, T_out), jnp.float32)
    for k in range(K):
        xs = xr[:, :, k:k + stride * (T_out - 1) + 1:stride]  # (N, C_in, T_out)
        y = y + jnp.einsum('nct,oc->not', xs, weight[:, :, k])
    y = y + bias[None, :, None]
    y = y.reshape(B, H, W, C_out, T_out)
    return jnp.transpose(y, (0, 3, 4, 1, 2)).astype(x.dtype)


if __name__ == "__main__":
    key = jax.random.PRNGKey(0)
    k_w, k_b, k_x = jax.random.split(key, 3)

    B, C_in, C_out, T, H, W, K = 2, 4, 8, 8, 16, 16, 3
    weight = jax.random.normal(k_w, (C_out, C_in, K), jnp.float32) / (C_in * K) ** 0.5
    bias = 0.1 * jax.random.normal(k_b, (C_out,), jnp.float32)
    x = jax.random.normal(k_x, (B, C_in, T, H, W), jnp.float32)

    T_out = (T - 1) // 2 + 1
    ref = _reference(x, weight, bias)

    # Primary (fused block-banded matmul) path.
    out = jax.block_until_ready(temporal_downsample2x(x, weight, bias))
    assert out.shape == (B, C_out, T_out, H, W), out.shape
    err = float(jnp.max(jnp.abs(out - ref)))
    assert jnp.allclose(out, ref, atol=5e-4, rtol=5e-4), f"fused max abs err {err}"

    # Fallback (per-tap) path, exercised explicitly so both code paths are tested.
    out2 = jax.block_until_ready(
        temporal_downsample2x(x, weight, bias, force_impl="tap"))
    assert out2.shape == (B, C_out, T_out, H, W), out2.shape
    err2 = float(jnp.max(jnp.abs(out2 - ref)))
    assert jnp.allclose(out2, ref, atol=5e-4, rtol=5e-4), f"tap max abs err {err2}"

    print("KERNEL_OK")
</pallas_src>

<mosaic_0001>
module attributes {stable_mosaic.version = 11 : i64} {
  func.func @_fused_kernel(%arg0: i32, %arg1: i32, %arg2: memref<1x32x128xf32, #tpu.memory_space<vmem>>, %arg3: memref<32x32xf32, #tpu.memory_space<vmem>>, %arg4: memref<32x1xf32, #tpu.memory_space<vmem>>, %arg5: memref<1x32x128xf32, #tpu.memory_space<vmem>>) attributes {dimension_semantics = [#tpu.dimension_semantics<parallel>, #tpu.dimension_semantics<parallel>], iteration_bounds = array<i64: 2, 2>, scalar_prefetch = 0 : i64, scratch_operands = 0 : i64, tpu.core_type = #tpu.core_type<tc>, window_params = [{transform_indices = @transform_0, window_bounds = array<i64: 1, 32, 128>}, {pipeline_mode = #tpu.pipeline_mode<synchronous>, transform_indices = @transform_1, window_bounds = array<i64: 32, 32>}, {pipeline_mode = #tpu.pipeline_mode<synchronous>, transform_indices = @transform_2, window_bounds = array<i64: 32, 1>}, {transform_indices = @transform_3, window_bounds = array<i64: 1, 32, 128>}]} {
    %c0 = arith.constant 0 : index
    %c0_0 = arith.constant 0 : index
    %0 = vector.load %arg3[%c0, %c0_0] : memref<32x32xf32, #tpu.memory_space<vmem>>, vector<32x32xf32>
    %c0_1 = arith.constant 0 : index
    %c0_2 = arith.constant 0 : index
    %c0_3 = arith.constant 0 : index
    %1 = vector.load %arg2[%c0_1, %c0_2, %c0_3] : memref<1x32x128xf32, #tpu.memory_space<vmem>>, vector<1x32x128xf32>
    %2 = vector.shape_cast %1 : vector<1x32x128xf32> to vector<32x128xf32>
    %cst = arith.constant dense<0.000000e+00> : vector<32x128xf32>
    %3 = tpu.matmul %0, %2, %cst {dimension_numbers = #tpu.dot_dimension_numbers<[1], [0], [0], [1], [0, 0, 1, 1], [], []>} : vector<32x32xf32>, vector<32x128xf32>, vector<32x128xf32> -> vector<32x128xf32>
    %c0_4 = arith.constant 0 : index
    %c0_5 = arith.constant 0 : index
    %4 = vector.load %arg4[%c0_4, %c0_5] : memref<32x1xf32, #tpu.memory_space<vmem>>, vector<32x1xf32>
    %5 = vector.broadcast %4 : vector<32x1xf32> to vector<32x128xf32>
    %6 = arith.addf %3, %5 : vector<32x128xf32>
    %c0_6 = arith.constant 0 : index
    %c0_7 = arith.constant 0 : index
    %c0_8 = arith.constant 0 : index
    %7 = vector.load %arg5[%c0_6, %c0_7, %c0_8] : memref<1x32x128xf32, #tpu.memory_space<vmem>>, vector<1x32x128xf32>
    %8 = vector.shape_cast %7 : vector<1x32x128xf32> to vector<32x128xf32>
    %9 = vector.shape_cast %6 : vector<32x128xf32> to vector<1x32x128xf32>
    tpu.vector_store %arg5[%c0_6, %c0_7, %c0_8], %9 {strides = array<i32>} : memref<1x32x128xf32, #tpu.memory_space<vmem>>, vector<1x32x128xf32>,
    return
  }
  func.func @transform_0(%arg0: i32, %arg1: i32) -> (i32, i32, i32) {
    %c0_i32 = arith.constant 0 : i32
    %c0_i32_0 = arith.constant 0 : i32
    return %arg0, %c0_i32, %arg1 : i32, i32, i32
  }
  func.func @transform_1(%arg0: i32, %arg1: i32) -> (i32, i32) {
    %c0_i32 = arith.constant 0 : i32
    %c0_i32_0 = arith.constant 0 : i32
    %c0_i32_1 = arith.constant 0 : i32
    return %c0_i32, %c0_i32_0 : i32, i32
  }
  func.func @transform_2(%arg0: i32, %arg1: i32) -> (i32, i32) {
    %c0_i32 = arith.constant 0 : i32
    %c0_i32_0 = arith.constant 0 : i32
    %c0_i32_1 = arith.constant 0 : i32
    return %c0_i32, %c0_i32_0 : i32, i32
  }
  func.func @transform_3(%arg0: i32, %arg1: i32) -> (i32, i32, i32) {
    %c0_i32 = arith.constant 0 : i32
    %c0_i32_0 = arith.constant 0 : i32
    return %arg0, %c0_i32, %arg1 : i32, i32, i32
  }
}

</mosaic_0001>

<llo_original>
// kernel: temporal_downsample2x.1
$region0: #{temporal_downsample2x.1}
  #allocation0 [shape = 'u32[]', space=smem, size = 0x4, offset = 0x4, fixed_abs, tag = 'smem constant byte address 0x4 - core index']
  #allocation1 [shape = 'u32[72,128]{1,0:T(1,128)}', space=vmem, size = 0x9000, scoped, tag = 'internal scratch']
  %s0 = inlined_call_operand.vmem [shape: f32[2,32,256], index: 0, kind: input, shape index: {}]
  %s1 = inlined_call_operand.vmem [shape: f32[32,32], index: 1, kind: input, shape index: {}]
  %s2 = inlined_call_operand.vmem [shape: f32[32,1], index: 2, kind: input, shape index: {}]
  %s3 = inlined_call_operand.vmem [shape: f32[2,32,256], index: 3, kind: output, shape index: {}]
  %s4 = sld [smem:[#allocation0]]
  $region117: #{temporal_downsample2x.1} parent=0
    _
  %s6 = ssub.s32 1, %s4
  %s7 = scalar_select 0, %s6, %s4
  $region1: #{temporal_downsample2x.1} parent=0
    #allocation2 [shape = 'u8[32768]{0}', space=vmem, size = 0x8000, scoped, tag = 'input window, operand 0']
    #allocation3 [shape = 'u8[32768]{0}', space=vmem, size = 0x8000, scoped, tag = 'output window, operand 0']
    loop: start=0, step=1, limit=6
    $region2: #{temporal_downsample2x.1} parent=1 // loop_pre_header
      _
    $region3: #{temporal_downsample2x.1} parent=1 // loop_header
      %s9 = sphi 0, %s13
      %p10 = scmp.ge.s32.totalorder %s9, 6
      %s16 = sphi 0, %s28
      %s17 = sphi 0, %s24
      %s18 = sphi 0, %s16
      %s19 = sphi 0, %s17
      %s20 = sphi 0, %s18
      %s21 = sphi 0, %s19
      %s33 = sphi 0, %s35
      %s36 = sphi 0, %s33
      %s37 = sphi 0, %s36
      %s53 = sphi 0, %s37
      %s57 = sphi 0, %s57
      %s59 = sphi 0, %s57
      %s60 = sphi 0, %s59
      %s74 = sphi 0, %s60
      %s78 = sphi 0, %s78
      %s80 = sphi 0, %s78
      %s81 = sphi 0, %s80
      %s95 = sphi 0, %s81
      %s103 = sphi 0, %s105
      %s106 = sphi 0, %s103
      %s107 = sphi 0, %s106
      %s123 = sphi 0, %s107
    $region4: #{temporal_downsample2x.1} parent=1 // loop_header_branch
      %12 = sbr.rel (%p10) target = $region8
    $region5: #{temporal_downsample2x.1} parent=1 // loop_body
      %s14 = ssub.s32 %s9, 1
      %s15 = ssub.s32 %s9, 2
      %s22 = sadd.s32 1, %s17
      %p23 = scmp.ge.s32.totalorder %s22, 2
      %s24 = scalar_select %p23, 0, %s22
      %s25 = sadd.s32 1, %s16
      %s26 = scalar_select %p23, %s25, %s16
      %p27 = scmp.ge.s32.totalorder %s26, 2
      %s28 = scalar_select %p27, 0, %s26
      %s29 = ssub.s32 %s16, %s28
      %s30 = ssub.s32 %s17, %s24
      %s31 = sor.u32 %s29, %s30
      %p32 = scmp.eq.s32.totalorder %s31, 0
      %s34 = sadd.s32 %s33, 1
      %s35 = scalar_select %p32, %s33, %s34
      %p38 = pneg %p32
      %p39 = scmp.eq.s32.totalorder %s9, 3
      %p40 = por %p38, %p39
      %p41 = scmp.ne.s32.totalorder %s33, %s36
      %p42 = scmp.eq.s32.totalorder %s9, 0
      %p43 = por %p41, %p42
      %p44 = scmp.ne.s32.totalorder %s33, %s36
      %p45 = scmp.eq.s32.totalorder %s14, 3
      %p46 = por %p44, %p45
      %p47 = scmp.ne.s32.totalorder %s36, %s37
      %p48 = scmp.eq.s32.totalorder %s14, 0
      %p49 = por %p47, %p48
      %p50 = scmp.ne.s32.totalorder %s36, %s37
      %p51 = scmp.eq.s32.totalorder %s15, 3
      %p52 = por %p50, %p51
      %p54 = scmp.ne.s32.totalorder %s37, %s53
      %p55 = scmp.eq.s32.totalorder %s15, 0
      %p56 = por %p54, %p55
      %s58 = sadd.s32 %s57, 1
      %p61 = scmp.eq.s32.totalorder %s9, 3
      %p62 = scmp.ne.s32.totalorder %s57, %s59
      %p63 = scmp.eq.s32.totalorder %s9, 0
      %p64 = por %p62, %p63
      %p65 = scmp.ne.s32.totalorder %s57, %s59
      %p66 = scmp.eq.s32.totalorder %s14, 3
      %p67 = por %p65, %p66
      %p68 = scmp.ne.s32.totalorder %s59, %s60
      %p69 = scmp.eq.s32.totalorder %s14, 0
      %p70 = por %p68, %p69
      %p71 = scmp.ne.s32.totalorder %s59, %s60
      %p72 = scmp.eq.s32.totalorder %s15, 3
      %p73 = por %p71, %p72
      %p75 = scmp.ne.s32.totalorder %s60, %s74
      %p76 = scmp.eq.s32.totalorder %s15, 0
      %p77 = por %p75, %p76
      %s79 = sadd.s32 %s78, 1
      %p82 = scmp.eq.s32.totalorder %s9, 3
      %p83 = scmp.ne.s32.totalorder %s78, %s80
      %p84 = scmp.eq.s32.totalorder %s9, 0
      %p85 = por %p83, %p84
      %p86 = scmp.ne.s32.totalorder %s78, %s80
      %p87 = scmp.eq.s32.totalorder %s14, 3
      %p88 = por %p86, %p87
      %p89 = scmp.ne.s32.totalorder %s80, %s81
      %p90 = scmp.eq.s32.totalorder %s14, 0
      %p91 = por %p89, %p90
      %p92 = scmp.ne.s32.totalorder %s80, %s81
      %p93 = scmp.eq.s32.totalorder %s15, 3
      %p94 = por %p92, %p93
      %p96 = scmp.ne.s32.totalorder %s81, %s95
      %p97 = scmp.eq.s32.totalorder %s15, 0
      %p98 = por %p96, %p97
      %s99 = ssub.s32 %s16, %s28
      %s100 = ssub.s32 %s17, %s24
      %s101 = sor.u32 %s99, %s100
      %p102 = scmp.eq.s32.totalorder %s101, 0
      %s104 = sadd.s32 %s103, 1
      %s105 = scalar_select %p102, %s103, %s104
      %p108 = pneg %p102
      %p109 = scmp.eq.s32.totalorder %s9, 3
      %p110 = por %p108, %p109
      %p111 = scmp.ne.s32.totalorder %s103, %s106
      %p112 = scmp.eq.s32.totalorder %s9, 0
      %p113 = por %p111, %p112
      %p114 = scmp.ne.s32.totalorder %s103, %s106
      %p115 = scmp.eq.s32.totalorder %s14, 3
      %p116 = por %p114, %p115
      %p117 = scmp.ne.s32.totalorder %s106, %s107
      %p118 = scmp.eq.s32.totalorder %s14, 0
      %p119 = por %p117, %p118
      %p120 = scmp.ne.s32.totalorder %s106, %s107
      %p121 = scmp.eq.s32.totalorder %s15, 3
      %p122 = por %p120, %p121
      %p124 = scmp.ne.s32.totalorder %s107, %s123
      %p125 = scmp.eq.s32.totalorder %s15, 0
      %p126 = por %p124, %p125
      %p127 = scmp.le.s32.totalorder 1, %s9
      %p128 = scmp.lt.s32.totalorder %s9, 5
      %p129 = pnand %p127, %p128
      %p130 = pneg %p129
      // Predicated region
      $region9: #{temporal_downsample2x.1} parent=5 // pred_check
        _
      $region10: #{temporal_downsample2x.1} parent=5 // pred_check_branch
        %132 = sbr.rel (%p129) target = $region12
      $region11: #{temporal_downsample2x.1} parent=5 // pred_region
        %s133 = ssub.s32 %s9, 1
        // Predicated region
        $region13: #{temporal_downsample2x.1} parent=11 // pred_check
          %p134 = pneg %p70
        $region14: #{temporal_downsample2x.1} parent=11 // pred_check_branch
          %136 = sbr.rel (%p134) target = $region16
        $region15: #{temporal_downsample2x.1} parent=11 // pred_region
          _
        $region16: #{temporal_downsample2x.1} parent=11 // pred_fallthru
          _
        // Predicated region
        $region17: #{temporal_downsample2x.1} parent=11 // pred_check
          %p137 = pneg %p91
        $region18: #{temporal_downsample2x.1} parent=11 // pred_check_branch
          %139 = sbr.rel (%p137) target = $region20
        $region19: #{temporal_downsample2x.1} parent=11 // pred_region
          _
        $region20: #{temporal_downsample2x.1} parent=11 // pred_fallthru
          _
      $region12: #{temporal_downsample2x.1} parent=5 // pred_fallthru
        _
      %p140 = scmp.lt.s32.totalorder %s9, 4
      // Predicated region
      $region21: #{temporal_downsample2x.1} parent=5 // pred_check
        %p141 = pneg %p140
      $region22: #{temporal_downsample2x.1} parent=5 // pred_check_branch
        %143 = sbr.rel (%p141) target = $region24
      $region23: #{temporal_downsample2x.1} parent=5 // pred_region
        // Predicated region
        $region25: #{temporal_downsample2x.1} parent=23 // pred_check
          %p144 = pneg %p43
        $region26: #{temporal_downsample2x.1} parent=23 // pred_check_branch
          %146 = sbr.rel (%p144) target = $region28
        $region27: #{temporal_downsample2x.1} parent=23 // pred_region
          %s147 = sand.u32 %s33, 1
          %s148 = sand.u32 %s33, 1
          %s149 = smul.addr %s148, 32
          %s150 = scalar_lea.vmem [#allocation2], %s149
          %s151 = smul.addr %s16, 8
          %s152 = sadd.s32 %s17, %s151
          %s153 = smul.addr %s152, 8
          %s154 = scalar_lea.vmem %s0, %s153
          // Predicated region
          $region29: #{temporal_downsample2x.1} parent=27 // pred_check
            _
          $region30: #{temporal_downsample2x.1} parent=27 // pred_check_branch
            %156 = sbr.rel (0) target = $region32
          $region31: #{temporal_downsample2x.1} parent=27 // pred_region
            // Predicated region
            $region33: #{temporal_downsample2x.1} parent=31 // pred_check
              _
            $region34: #{temporal_downsample2x.1} parent=31 // pred_check_branch
              %158 = sbr.rel (0) target = $region36
            $region35: #{temporal_downsample2x.1} parent=31 // pred_region
              // Predicated region
              $region48: #{temporal_downsample2x.1} parent=35 // pred_check
                _
              $region49: #{temporal_downsample2x.1} parent=35 // pred_check_branch
                %180 = sbr.rel (0) target = $region51
              $region50: #{temporal_downsample2x.1} parent=35 // pred_region
                loop: start=0, step=1, limit=1
                $region52: #{temporal_downsample2x.1} parent=50 // loop_pre_header
                  _
                $region53: #{temporal_downsample2x.1} parent=50 // loop_header
                  %s182 = sphi 0, %s186
                  %p183 = scmp.ge.s32.totalorder %s182, 1
                  %s187 = sphi %s154, %s154
                  %s188 = sphi %s150, %s150
                $region54: #{temporal_downsample2x.1} parent=50 // loop_header_branch
                  %185 = sbr.rel (%p183) target = $region58
                $region55: #{temporal_downsample2x.1} parent=50 // loop_body
                  %v189 = vld [vmem:[%s187] sm:$0xff]
                  %190 = vst [vmem:[%s188] sm:$0xff] %v189
                  %v191 = vld [vmem:[%s187 + $0x10] sm:$0xff]
                  %192 = vst [vmem:[%s188 + $0x8] sm:$0xff] %v191
                  %v193 = vld [vmem:[%s187 + $0x20] sm:$0xff]
                  %194 = vst [vmem:[%s188 + $0x10] sm:$0xff] %v193
                  %v195 = vld [vmem:[%s187 + $0x30] sm:$0xff]
                  %196 = vst [vmem:[%s188 + $0x18] sm:$0xff] %v195
                $region56: #{temporal_downsample2x.1} parent=50 // loop_footer
                  %s186 = sadd.s32 1, %s182
                $region57: #{temporal_downsample2x.1} parent=50 // loop_footer_branch
                  %181 = sbr.rel target = $region53
                $region58: #{temporal_downsample2x.1} parent=50 // loop_exit
                  _
              $region51: #{temporal_downsample2x.1} parent=35 // pred_fallthru
                _
              // Predicated region
              $region59: #{temporal_downsample2x.1} parent=35 // pred_check
                _
              $region60: #{temporal_downsample2x.1} parent=35 // pred_check_branch
                %198 = sbr.rel target = $region62
              $region61: #{temporal_downsample2x.1} parent=35 // pred_region
                _
              $region62: #{temporal_downsample2x.1} parent=35 // pred_fallthru
                _
            $region36: #{temporal_downsample2x.1} parent=31 // pred_fallthru
              _
            // Predicated region
            $region37: #{temporal_downsample2x.1} parent=31 // pred_check
              _
            $region38: #{temporal_downsample2x.1} parent=31 // pred_check_branch
              %160 = sbr.rel target = $region40
            $region39: #{temporal_downsample2x.1} parent=31 // pred_region
              %s162 = ssub.s32 256, 1
              loop: start=0, step=1, limit=1
              $region41: #{temporal_downsample2x.1} parent=39 // loop_pre_header
                _
              $region42: #{temporal_downsample2x.1} parent=39 // loop_header
                %s164 = sphi 0, %s168
                %p165 = scmp.ge.s32.totalorder %s164, 1
                %s169 = sphi %s154, %s154
                %s170 = sphi %s150, %s150
              $region43: #{temporal_downsample2x.1} parent=39 // loop_header_branch
                %167 = sbr.rel (%p165) target = $region47
              $region44: #{temporal_downsample2x.1} parent=39 // loop_body
                %v171 = vld [vmem:[%s169] sm:%s162]
                %172 = vst [vmem:[%s170] sm:%s162] %v171
                %v173 = vld [vmem:[%s169 + $0x10] sm:%s162]
                %174 = vst [vmem:[%s170 + $0x8] sm:%s162] %v173
                %v175 = vld [vmem:[%s169 + $0x20] sm:%s162]
                %176 = vst [vmem:[%s170 + $0x10] sm:%s162] %v175
                %v177 = vld [vmem:[%s169 + $0x30] sm:%s162]
                %178 = vst [vmem:[%s170 + $0x18] sm:%s162] %v177
              $region45: #{temporal_downsample2x.1} parent=39 // loop_footer
                %s168 = sadd.s32 1, %s164
              $region46: #{temporal_downsample2x.1} parent=39 // loop_footer_branch
                %163 = sbr.rel target = $region42
              $region47: #{temporal_downsample2x.1} parent=39 // loop_exit
                _
            $region40: #{temporal_downsample2x.1} parent=31 // pred_fallthru
              _
          $region32: #{temporal_downsample2x.1} parent=27 // pred_fallthru
            _
          %199 = vnop
        $region28: #{temporal_downsample2x.1} parent=23 // pred_fallthru
          _
      $region24: #{temporal_downsample2x.1} parent=5 // pred_fallthru
        _
      %p200 = scmp.le.s32.totalorder 1, %s9
      %p201 = scmp.lt.s32.totalorder %s9, 5
      %p202 = pnand %p200, %p201
      %p203 = pneg %p202
      // Predicated region
      $region63: #{temporal_downsample2x.1} parent=5 // pred_check
        _
      $region64: #{temporal_downsample2x.1} parent=5 // pred_check_branch
        %205 = sbr.rel (%p202) target = $region66
      $region65: #{temporal_downsample2x.1} parent=5 // pred_region
        %s206 = ssub.s32 %s9, 1
        %s207 = sand.u32 %s36, 1
        %s208 = sand.u32 %s36, 1
        %s209 = smul.addr %s208, 32
        %s210 = scalar_lea.vmem [#allocation2], %s209
        // Predicated region
        $region67: #{temporal_downsample2x.1} parent=65 // pred_check
          %p211 = pneg %p49
        $region68: #{temporal_downsample2x.1} parent=65 // pred_check_branch
          %213 = sbr.rel (%p211) target = $region70
        $region69: #{temporal_downsample2x.1} parent=65 // pred_region
          _
        $region70: #{temporal_downsample2x.1} parent=65 // pred_fallthru
          _
        %s214 = sand.u32 %s36, 1
        %s215 = sand.u32 %s36, 1
        %s216 = smul.addr %s215, 32
        %s217 = scalar_lea.vmem [#allocation2], %s216
        %p218 = pneg %p49
        %p219 = pneg %p46
        %p220 = pneg %p70
        %p221 = pneg %p67
        %p222 = pneg %p91
        %p223 = pneg %p88
        %p224 = pneg %p119
        %p225 = pneg %p116
        %s226 = sand.u32 %s106, 1
        %s227 = sand.u32 %s106, 1
        %s228 = smul.addr %s227, 32
        %s229 = scalar_lea.vmem [#allocation3], %s228
        %v230 = vld [vmem:[%s1] sm:$0xff]
        %v231 = vld [vmem:[%s1 + $0x8] sm:$0xff]
        %v232 = vld [vmem:[%s1 + $0x10] sm:$0xff]
        %v233 = vld [vmem:[%s1 + $0x18] sm:$0xff]
        %v234 = vld [vmem:[%s210] sm:$0xff]
        %v235 = vld [vmem:[%s210 + $0x8] sm:$0xff]
        %v236 = vld [vmem:[%s210 + $0x10] sm:$0xff]
        %v237 = vld [vmem:[%s210 + $0x18] sm:$0xff]
        %v238 = vld [vmem:[%s2] sm:$0xff]
        %v239 = vld [vmem:[%s2 + $0x8] sm:$0xff]
        %v240 = vld [vmem:[%s2 + $0x10] sm:$0xff]
        %v241 = vld [vmem:[%s2 + $0x18] sm:$0xff]
        %243 = vset.pattern.permute.xlu0 0
        %244 = vperm.xlu0 %243, %v238
        %v245 = vpop.permute.xlu0 %244
        %248 = vset.pattern.permute.xlu0 0
        %249 = vperm.xlu0 %248, %v239
        %v250 = vpop.permute.xlu0 %249
        %253 = vset.pattern.permute.xlu0 0
        %254 = vperm.xlu0 %253, %v240
        %v255 = vpop.permute.xlu0 %254
        %258 = vset.pattern.permute.xlu0 0
        %259 = vperm.xlu0 %258, %v241
        %v260 = vpop.permute.xlu0 %259
        %vm262 = vcmask 261120
        %v264 = vsel %vm262, %v230, 0
        %v267 = vsel %vm262, %v231, 0
        %v270 = vsel %vm262, %v232, 0
        %v273 = vsel %vm262, %v233, 0
        %275 = vmatpush.msra.mxu0 0.0
        %276 = vmatpush.msra.mxu0 0.0
        %277 = vmatpush.msra.mxu0 0.0
        %278 = vmatpush.msra.mxu0 0.0
        %279 = vmatpush.msra.mxu0 0.0
        %280 = vmatpush.msra.mxu0 0.0
        %281 = vmatpush.msra.mxu0 0.0
        %282 = vmatpush.msra.mxu0 0.0
        %283 = vmatpush.msra.mxu0 0.0
        %284 = vmatpush.msra.mxu0 0.0
        %285 = vmatpush.msra.mxu0 0.0
        %286 = vmatpush.msra.mxu0 0.0
        %287 = vmatpush.msra.mxu0 %v237
        %288 = vmatpush.msra.mxu0 %v236
        %289 = vmatpush.msra.mxu0 %v235
        %290 = vmatpush.msra.mxu0 %v234
        %291 = vmatmul.f32.gmra.mxu0 %v264
        %v292 = vpop.f32.mrf.mxu0
        %v293 = vadd.f32 %v245, %v292
        %294 = vmatmul.f32.gmra.mxu0 %v267
        %v295 = vpop.f32.mrf.mxu0
        %v296 = vadd.f32 %v250, %v295
        %297 = vmatmul.f32.gmra.mxu0 %v270
        %v298 = vpop.f32.mrf.mxu0
        %v299 = vadd.f32 %v255, %v298
        %300 = vmatmul.f32.gmra.mxu0 %v273
        %v301 = vpop.f32.mrf.mxu0
        %v302 = vadd.f32 %v260, %v301
        %303 = vdwg.mxu0
        %304 = vst [vmem:[%s229] sm:$0xff] %v293
        %305 = vst [vmem:[%s229 + $0x8] sm:$0xff] %v296
        %306 = vst [vmem:[%s229 + $0x10] sm:$0xff] %v299
        %307 = vst [vmem:[%s229 + $0x18] sm:$0xff] %v302
        %s308 = sand.u32 %s106, 1
        %s309 = sand.u32 %s106, 1
        %s310 = smul.addr %s309, 32
        %s311 = scalar_lea.vmem [#allocation3], %s310
        // Predicated region
        $region71: #{temporal_downsample2x.1} parent=65 // pred_check
          %p312 = pneg %p116
        $region72: #{temporal_downsample2x.1} parent=65 // pred_check_branch
          %314 = sbr.rel (%p312) target = $region74
        $region73: #{temporal_downsample2x.1} parent=65 // pred_region
          %s315 = smul.addr %s18, 8
          %s316 = sadd.s32 %s19, %s315
          %s317 = smul.addr %s316, 8
          %s318 = scalar_lea.vmem %s3, %s317
          // Predicated region
          $region75: #{temporal_downsample2x.1} parent=73 // pred_check
            _
          $region76: #{temporal_downsample2x.1} parent=73 // pred_check_branch
            %320 = sbr.rel (0) target = $region78
          $region77: #{temporal_downsample2x.1} parent=73 // pred_region
            // Predicated region
            $region79: #{temporal_downsample2x.1} parent=77 // pred_check
              _
            $region80: #{temporal_downsample2x.1} parent=77 // pred_check_branch
              %322 = sbr.rel (0) target = $region82
            $region81: #{temporal_downsample2x.1} parent=77 // pred_region
              // Predicated region
              $region94: #{temporal_downsample2x.1} parent=81 // pred_check
                _
              $region95: #{temporal_downsample2x.1} parent=81 // pred_check_branch
                %344 = sbr.rel (0) target = $region97
              $region96: #{temporal_downsample2x.1} parent=81 // pred_region
                loop: start=0, step=1, limit=1
                $region98: #{temporal_downsample2x.1} parent=96 // loop_pre_header
                  _
                $region99: #{temporal_downsample2x.1} parent=96 // loop_header
                  %s346 = sphi 0, %s350
                  %p347 = scmp.ge.s32.totalorder %s346, 1
                  %s351 = sphi %s311, %s311
                  %s352 = sphi %s318, %s318
                $region100: #{temporal_downsample2x.1} parent=96 // loop_header_branch
                  %349 = sbr.rel (%p347) target = $region104
                $region101: #{temporal_downsample2x.1} parent=96 // loop_body
                  %v353 = vld [vmem:[%s351] sm:$0xff]
                  %354 = vst [vmem:[%s352] sm:$0xff] %v353
                  %v355 = vld [vmem:[%s351 + $0x8] sm:$0xff]
                  %356 = vst [vmem:[%s352 + $0x10] sm:$0xff] %v355
                  %v357 = vld [vmem:[%s351 + $0x10] sm:$0xff]
                  %358 = vst [vmem:[%s352 + $0x20] sm:$0xff] %v357
                  %v359 = vld [vmem:[%s351 + $0x18] sm:$0xff]
                  %360 = vst [vmem:[%s352 + $0x30] sm:$0xff] %v359
                $region102: #{temporal_downsample2x.1} parent=96 // loop_footer
                  %s350 = sadd.s32 1, %s346
                $region103: #{temporal_downsample2x.1} parent=96 // loop_footer_branch
                  %345 = sbr.rel target = $region99
                $region104: #{temporal_downsample2x.1} parent=96 // loop_exit
                  _
              $region97: #{temporal_downsample2x.1} parent=81 // pred_fallthru
                _
              // Predicated region
              $region105: #{temporal_downsample2x.1} parent=81 // pred_check
                _
              $region106: #{temporal_downsample2x.1} parent=81 // pred_check_branch
                %362 = sbr.rel target = $region108
              $region107: #{temporal_downsample2x.1} parent=81 // pred_region
                _
              $region108: #{temporal_downsample2x.1} parent=81 // pred_fallthru
                _
            $region82: #{temporal_downsample2x.1} parent=77 // pred_fallthru
              _
            // Predicated region
            $region83: #{temporal_downsample2x.1} parent=77 // pred_check
              _
            $region84: #{temporal_downsample2x.1} parent=77 // pred_check_branch
              %324 = sbr.rel target = $region86
            $region85: #{temporal_downsample2x.1} parent=77 // pred_region
              %s326 = ssub.s32 256, 1
              loop: start=0, step=1, limit=1
              $region87: #{temporal_downsample2x.1} parent=85 // loop_pre_header
                _
              $region88: #{temporal_downsample2x.1} parent=85 // loop_header
                %s328 = sphi 0, %s332
                %p329 = scmp.ge.s32.totalorder %s328, 1
                %s333 = sphi %s311, %s311
                %s334 = sphi %s318, %s318
              $region89: #{temporal_downsample2x.1} parent=85 // loop_header_branch
                %331 = sbr.rel (%p329) target = $region93
              $region90: #{temporal_downsample2x.1} parent=85 // loop_body
                %v335 = vld [vmem:[%s333] sm:%s326]
                %336 = vst [vmem:[%s334] sm:%s326] %v335
                %v337 = vld [vmem:[%s333 + $0x8] sm:%s326]
                %338 = vst [vmem:[%s334 + $0x10] sm:%s326] %v337
                %v339 = vld [vmem:[%s333 + $0x10] sm:%s326]
                %340 = vst [vmem:[%s334 + $0x20] sm:%s326] %v339
                %v341 = vld [vmem:[%s333 + $0x18] sm:%s326]
                %342 = vst [vmem:[%s334 + $0x30] sm:%s326] %v341
              $region91: #{temporal_downsample2x.1} parent=85 // loop_footer
                %s332 = sadd.s32 1, %s328
              $region92: #{temporal_downsample2x.1} parent=85 // loop_footer_branch
                %327 = sbr.rel target = $region88
              $region93: #{temporal_downsample2x.1} parent=85 // loop_exit
                _
            $region86: #{temporal_downsample2x.1} parent=77 // pred_fallthru
              _
          $region78: #{temporal_downsample2x.1} parent=73 // pred_fallthru
            _
          %363 = vnop
        $region74: #{temporal_downsample2x.1} parent=65 // pred_fallthru
          _
      $region66: #{temporal_downsample2x.1} parent=5 // pred_fallthru
        _
      %p364 = scmp.le.s32.totalorder 2, %s9
      // Predicated region
      $region109: #{temporal_downsample2x.1} parent=5 // pred_check
        %p365 = pneg %p364
      $region110: #{temporal_downsample2x.1} parent=5 // pred_check_branch
        %367 = sbr.rel (%p365) target = $region112
      $region111: #{temporal_downsample2x.1} parent=5 // pred_region
        %s368 = ssub.s32 %s9, 2
        // Predicated region
        $region113: #{temporal_downsample2x.1} parent=111 // pred_check
          %p369 = pneg %p122
        $region114: #{temporal_downsample2x.1} parent=111 // pred_check_branch
          %371 = sbr.rel (%p369) target = $region116
        $region115: #{temporal_downsample2x.1} parent=111 // pred_region
          %s372 = sand.u32 %s107, 1
          %s373 = sand.u32 %s107, 1
          %s374 = smul.addr %s373, 32
          %s375 = scalar_lea.vmem [#allocation3], %s374
        $region116: #{temporal_downsample2x.1} parent=111 // pred_fallthru
          _
      $region112: #{temporal_downsample2x.1} parent=5 // pred_fallthru
        _
    $region6: #{temporal_downsample2x.1} parent=1 // loop_footer
      %s13 = sadd.s32 1, %s9
    $region7: #{temporal_downsample2x.1} parent=1 // loop_footer_branch
      %8 = sbr.rel target = $region3
    $region8: #{temporal_downsample2x.1} parent=1 // loop_exit
      _

</llo_original>
